<compile_context>
chip_gen: v7x
topology: tpu7x:2x2x1
jax: 0.10.0
libtpu: 0.0.40
codegen_flags: <defaults>
</compile_context>

<pallas_src>
import math
import numpy as np
import jax
import jax.numpy as jnp
from jax.experimental import pallas as pl
from jax.experimental.pallas import tpu as pltpu


# ----------------------------------------------------------------------------
# Small helpers
# ----------------------------------------------------------------------------
def _round_up(a, b):
    return ((a + b - 1) // b) * b


def _pad_to(arr, shape):
    pads = [(0, t - s) for s, t in zip(arr.shape, shape)]
    if any(p[1] for p in pads):
        return jnp.pad(arr, pads)
    return arr


# ----------------------------------------------------------------------------
# Host-side (plain JAX) glue: compose the butterfly stages exactly.
# ----------------------------------------------------------------------------
def build_cos_sin_stacks(angles, d):
    """Per-stage cos/sin vectors, exactly like the reference python loop."""
    all_theta = jnp.tanh(angles.astype(jnp.float32)) * math.pi
    cur_cnt, step_size, flag = d, 1, 0
    cos_list, sin_list = [], []
    idx = np.arange(d)
    while True:
        left = cur_cnt % 2
        cur_cnt = cur_cnt // 2
        theta = all_theta[flag:flag + cur_cnt]
        cos_s, sin_s = jnp.cos(theta), jnp.sin(theta)
        pos_even = idx[::step_size * 2][:cur_cnt]
        pos_odd = idx[step_size::step_size * 2][:cur_cnt]
        cos_vec = (jnp.ones((d,), jnp.float32)
                   .at[pos_even].set(cos_s).at[pos_odd].set(cos_s))
        sin_vec = (jnp.zeros((d,), jnp.float32)
                   .at[pos_even].set(sin_s).at[pos_odd].set(sin_s))
        step_size *= 2
        flag += cur_cnt
        cur_cnt += left
        cos_list.append(cos_vec)
        sin_list.append(sin_vec)
        if cur_cnt == 1:
            break
    return jnp.stack(cos_list), jnp.stack(sin_list)   # (L, D) each


def build_composed_rotation(angles, scaler, d):
    """Compose ALL butterfly stages (+ the scaler) into one per-pair 2x2 map.

    Every stage mixes only the adjacent (2k, 2k+1) pair, so in de-interleaved
    (xe, xo) coordinates each stage is an element-wise 2x2 matrix
    [[ce, -se], [so, co]]; composing them (and folding the per-feature scaler)
    is exact.  Returns A, B, C, D of shape (d//2,) such that
        xe' = A*xe + B*xo ,  xo' = C*xe + D*xo .
    """
    all_theta = jnp.tanh(angles.astype(jnp.float32)) * math.pi
    dh = d // 2
    A = jnp.ones((dh,), jnp.float32)
    B = jnp.zeros((dh,), jnp.float32)
    C = jnp.zeros((dh,), jnp.float32)
    D = jnp.ones((dh,), jnp.float32)
    cur_cnt, step_size, flag = d, 1, 0
    idx = np.arange(d)
    while True:
        left = cur_cnt % 2
        cur_cnt = cur_cnt // 2
        theta = all_theta[flag:flag + cur_cnt]
        cos_s, sin_s = jnp.cos(theta), jnp.sin(theta)
        pos_even = idx[::step_size * 2][:cur_cnt]
        pos_odd = idx[step_size::step_size * 2][:cur_cnt]
        cos_vec = (jnp.ones((d,), jnp.float32)
                   .at[pos_even].set(cos_s).at[pos_odd].set(cos_s))
        sin_vec = (jnp.zeros((d,), jnp.float32)
                   .at[pos_even].set(sin_s).at[pos_odd].set(sin_s))
        ce, co = cos_vec[0::2], cos_vec[1::2]
        se, so = sin_vec[0::2], sin_vec[1::2]
        # composite <- M_stage @ composite
        A, B, C, D = (ce * A - se * C, ce * B - se * D,
                      so * A + co * C, so * B + co * D)
        step_size *= 2
        flag += cur_cnt
        cur_cnt += left
        if cur_cnt == 1:
            break
    sc_e = scaler[0::2].astype(jnp.float32)
    sc_o = scaler[1::2].astype(jnp.float32)
    return A * sc_e, B * sc_e, C * sc_o, D * sc_o


def fold_rotation_into_weight(weight, givens_hard, givens_scaler):
    """Exact fold of rotation+scaler into the base weight (f32, host side).

    result = rot(x) @ W.T  ==  x @ W_eff.T  with
      W_eff[:,2k]   = A_k*W[:,2k] + C_k*W[:,2k+1]
      W_eff[:,2k+1] = B_k*W[:,2k] + D_k*W[:,2k+1]
    """
    d_out, d_in = weight.shape
    A, B, C, D = build_composed_rotation(givens_hard, givens_scaler, d_in)
    w = weight.astype(jnp.float32)
    we, wo = w[:, 0::2], w[:, 1::2]                    # (out, dh) each
    w_eff = jnp.stack([we * A + wo * C, we * B + wo * D],
                      axis=-1).reshape(d_out, d_in)
    return w_eff


# ----------------------------------------------------------------------------
# Pallas kernels: tiled bf16 matmul (+ bias), f32 accumulation.
# ----------------------------------------------------------------------------
def _matmul_bias_kernel(x_ref, w_ref, b_ref, o_ref, acc_ref):
    """K-tiled path: f32 VMEM accumulator with pl.when init/finalize."""
    k = pl.program_id(2)

    @pl.when(k == 0)
    def _init():
        acc_ref[...] = jnp.zeros_like(acc_ref)

    acc_ref[...] += jnp.dot(x_ref[...], w_ref[...],
                            preferred_element_type=jnp.float32)

    @pl.when(k == pl.num_programs(2) - 1)
    def _store():
        o_ref[...] = (acc_ref[...] + b_ref[...]).astype(o_ref.dtype)


def _matmul_bias_single_k_kernel(x_ref, w_ref, b_ref, o_ref):
    """Single-K-tile fast path: no accumulator scratch / init / finalize."""
    o_ref[...] = (jnp.dot(x_ref[...], w_ref[...],
                          preferred_element_type=jnp.float32)
                  + b_ref[...]).astype(o_ref.dtype)


def givens_linear(x, givens_hard, givens_scaler, weight, bias, *,
                  bm=256, bn=512, bk=1024):
    """Forward of the Givens Linear adapter (strict_oft=True, scaling on).

    bm/bn/bk are batch / out_features / in_features tile targets.  Defaults
    (~4.5 MiB double-buffered working set) fit v5e's 16 MiB scoped-VMEM
    default, v6e's 32 MiB, and v7x's 64 MiB physical VMEM — keep them on all
    three generations; raise pltpu.CompilerParams(vmem_limit_bytes=...) rather
    than shrinking tiles if you enlarge them further.
    """
    d_out, d_in = weight.shape
    assert d_in % 2 == 0, "butterfly composition assumes even in_features"

    # Host side: fold all rotation stages + scaler into the base weight (f32,
    # exact), then quantize the single effective weight to bf16 for the MXU.
    w_eff_t = fold_rotation_into_weight(
        weight, givens_hard, givens_scaler).T.astype(jnp.bfloat16)  # (d_in, d_out)

    orig_shape = x.shape
    xf = x.reshape(-1, d_in).astype(jnp.bfloat16)   # bf16 activation stream
    b_flat = xf.shape[0]

    if bias is None:
        bias2 = jnp.zeros((1, d_out), jnp.float32)
    else:
        bias2 = bias.astype(jnp.float32).reshape(1, d_out)

    # --- tile sizes (sublane/lane aligned) and padded problem sizes ----------
    tm = bm if b_flat > bm else _round_up(b_flat, 16)     # bf16 sublane tile
    mp = _round_up(b_flat, tm)
    tn = bn if d_out > bn else _round_up(d_out, 128)      # lane-dense output
    if mp // tm == 1 and d_out > 128:
        # v7x megacore: keep >=2 iterations on a 'parallel' axis when the M
        # grid collapses to a single tile, so both TensorCores get work.
        while _round_up(d_out, tn) // tn < 2 and tn > 128:
            tn = max(128, _round_up(tn // 2, 128))
    np_out = _round_up(d_out, tn)
    tk = bk if d_in > bk else _round_up(d_in, 128)
    kp = _round_up(d_in, tk)

    xf = _pad_to(xf, (mp, kp))
    w_eff_t = _pad_to(w_eff_t, (kp, np_out))
    bias2 = _pad_to(bias2, (1, np_out))

    out_dtype = x.dtype
    cost = pl.CostEstimate(
        flops=2 * mp * kp * np_out,
        transcendentals=0,
        bytes_accessed=(mp * kp * 2 + kp * np_out * 2 + np_out * 4
                        + mp * np_out * jnp.dtype(out_dtype).itemsize),
    )

    n_k = kp // tk
    if n_k == 1:
        # Typical adapter in_features fit one K tile: skip the accumulator.
        out = pl.pallas_call(
            _matmul_bias_single_k_kernel,
            out_shape=jax.ShapeDtypeStruct((mp, np_out), out_dtype),
            grid=(mp // tm, np_out // tn),
            in_specs=[pl.BlockSpec((tm, tk), lambda i, j: (i, 0)),
                      pl.BlockSpec((tk, tn), lambda i, j: (0, j)),
                      pl.BlockSpec((1, tn), lambda i, j: (0, j))],
            out_specs=pl.BlockSpec((tm, tn), lambda i, j: (i, j)),
            compiler_params=pltpu.CompilerParams(
                dimension_semantics=("parallel", "parallel")),
            cost_estimate=cost,
        )(xf, w_eff_t, bias2)
    else:
        out = pl.pallas_call(
            _matmul_bias_kernel,
            out_shape=jax.ShapeDtypeStruct((mp, np_out), out_dtype),
            grid=(mp // tm, np_out // tn, n_k),        # reduction axis last
            in_specs=[pl.BlockSpec((tm, tk), lambda i, j, k: (i, k)),
                      pl.BlockSpec((tk, tn), lambda i, j, k: (k, j)),
                      pl.BlockSpec((1, tn), lambda i, j, k: (0, j))],
            out_specs=pl.BlockSpec((tm, tn), lambda i, j, k: (i, j)),
            scratch_shapes=[pltpu.VMEM((tm, tn), jnp.float32)],
            compiler_params=pltpu.CompilerParams(
                dimension_semantics=("parallel", "parallel", "arbitrary")),
            cost_estimate=cost,
        )(xf, w_eff_t, bias2)

    out = out[:b_flat, :d_out]
    return out.reshape(orig_shape[:-1] + (d_out,))


# ----------------------------------------------------------------------------
# Pure-JAX reference (direct transliteration of the PyTorch forward) for check.
# ----------------------------------------------------------------------------
def reference_forward(x, givens_hard, givens_scaler, weight, bias):
    d_in = weight.shape[1]
    cos_stack, sin_stack = build_cos_sin_stacks(givens_hard, d_in)
    xf = x.reshape(-1, d_in).astype(jnp.float32)
    for l in range(cos_stack.shape[0]):
        cos_v, sin_v = cos_stack[l], sin_stack[l]
        x_sin = jnp.stack([-xf[:, 1::2], xf[:, 0::2]], axis=-1).reshape(xf.shape)
        xf = xf * cos_v + x_sin * sin_v
    xf = xf * givens_scaler
    out = xf @ weight.T.astype(jnp.float32) + bias
    return out.reshape(x.shape[:-1] + (weight.shape[0],)).astype(x.dtype)


if __name__ == "__main__":
    B, S, D_IN, D_OUT = 2, 8, 32, 64   # batch=2, seq=8, hidden=32 -> 64

    key = jax.random.PRNGKey(0)
    k1, k2, k3, k4, k5 = jax.random.split(key, 5)

    x = jax.random.normal(k1, (B, S, D_IN), jnp.float32)
    # adapter params (deterministic synthetic init, shapes per update_layer):
    givens_hard = jax.random.normal(k2, (D_IN - 1,), jnp.float32)     # angles
    givens_scaler = jax.random.normal(k3, (D_IN,), jnp.float32)       # scalings
    # base nn.Linear(in=32, out=64) weight / bias:
    weight = jax.random.normal(k4, (D_OUT, D_IN), jnp.float32) / math.sqrt(D_IN)
    bias = jax.random.normal(k5, (D_OUT,), jnp.float32) * 0.1

    out = givens_linear(x, givens_hard, givens_scaler, weight, bias)
    jax.block_until_ready(out)

    ref = reference_forward(x, givens_hard, givens_scaler, weight, bias)
    assert out.shape == (B, S, D_OUT)
    assert out.dtype == x.dtype
    # bf16 MXU operands (x and folded W_eff), f32 accumulation -> widened
    # tolerance vs the pure-f32 reference.
    np.testing.assert_allclose(np.asarray(out), np.asarray(ref),
                               rtol=3e-2, atol=3e-2)
    print("KERNEL_OK")
</pallas_src>

<mosaic_0001>
module attributes {stable_mosaic.version = 11 : i64} {
  func.func @_matmul_bias_single_k_kernel(%arg0: i32, %arg1: i32, %arg2: memref<16x128xbf16, #tpu.memory_space<vmem>>, %arg3: memref<128x128xbf16, #tpu.memory_space<vmem>>, %arg4: memref<1x128xf32, #tpu.memory_space<vmem>>, %arg5: memref<16x128xf32, #tpu.memory_space<vmem>>) attributes {dimension_semantics = [#tpu.dimension_semantics<parallel>, #tpu.dimension_semantics<parallel>], iteration_bounds = array<i64: 1, 1>, scalar_prefetch = 0 : i64, scratch_operands = 0 : i64, tpu.core_type = #tpu.core_type<tc>, window_params = [{transform_indices = @transform_0, window_bounds = array<i64: 16, 128>}, {transform_indices = @transform_1, window_bounds = array<i64: 128, 128>}, {transform_indices = @transform_2, window_bounds = array<i64: 1, 128>}, {transform_indices = @transform_3, window_bounds = array<i64: 16, 128>}]} {
    %c0 = arith.constant 0 : index
    %c0_0 = arith.constant 0 : index
    %0 = vector.load %arg2[%c0, %c0_0] : memref<16x128xbf16, #tpu.memory_space<vmem>>, vector<16x128xbf16>
    %c0_1 = arith.constant 0 : index
    %c0_2 = arith.constant 0 : index
    %1 = vector.load %arg3[%c0_1, %c0_2] : memref<128x128xbf16, #tpu.memory_space<vmem>>, vector<128x128xbf16>
    %cst = arith.constant dense<0.000000e+00> : vector<16x128xf32>
    %2 = tpu.matmul %0, %1, %cst {dimension_numbers = #tpu.dot_dimension_numbers<[1], [0], [0], [1], [0, 0, 1, 1], [], []>} : vector<16x128xbf16>, vector<128x128xbf16>, vector<16x128xf32> -> vector<16x128xf32>
    %c0_3 = arith.constant 0 : index
    %c0_4 = arith.constant 0 : index
    %3 = vector.load %arg4[%c0_3, %c0_4] : memref<1x128xf32, #tpu.memory_space<vmem>>, vector<1x128xf32>
    %4 = vector.broadcast %3 : vector<1x128xf32> to vector<16x128xf32>
    %5 = arith.addf %2, %4 : vector<16x128xf32>
    %c0_5 = arith.constant 0 : index
    %c0_6 = arith.constant 0 : index
    %6 = vector.load %arg5[%c0_5, %c0_6] : memref<16x128xf32, #tpu.memory_space<vmem>>, vector<16x128xf32>
    tpu.vector_store %arg5[%c0_5, %c0_6], %5 {strides = array<i32>} : memref<16x128xf32, #tpu.memory_space<vmem>>, vector<16x128xf32>,
    return
  }
  func.func @transform_0(%arg0: i32, %arg1: i32) -> (i32, i32) {
    %c0_i32 = arith.constant 0 : i32
    %c0_i32_0 = arith.constant 0 : i32
    return %arg0, %c0_i32 : i32, i32
  }
  func.func @transform_1(%arg0: i32, %arg1: i32) -> (i32, i32) {
    %c0_i32 = arith.constant 0 : i32
    %c0_i32_0 = arith.constant 0 : i32
    return %c0_i32, %arg1 : i32, i32
  }
  func.func @transform_2(%arg0: i32, %arg1: i32) -> (i32, i32) {
    %c0_i32 = arith.constant 0 : i32
    %c0_i32_0 = arith.constant 0 : i32
    return %c0_i32, %arg1 : i32, i32
  }
  func.func @transform_3(%arg0: i32, %arg1: i32) -> (i32, i32) {
    %c0_i32 = arith.constant 0 : i32
    return %arg0, %arg1 : i32, i32
  }
}

</mosaic_0001>

<llo_original>
// kernel: tpu_custom_call.1
$region0: #{tpu_custom_call.1}
  #allocation0 [shape = 'u32[]', space=smem, size = 0x4, offset = 0x4, fixed_abs, tag = 'smem constant byte address 0x4 - core index']
  #allocation1 [shape = 'u32[144,128]{1,0:T(1,128)}', space=vmem, size = 0x12000, scoped, tag = 'internal scratch']
  %s0 = inlined_call_operand.hbm [shape: bf16[16,128], index: 0, kind: input, shape index: {}]
  %s1 = inlined_call_operand.hbm [shape: bf16[128,128], index: 1, kind: input, shape index: {}]
  %s2 = inlined_call_operand.vmem [shape: f32[1,128], index: 2, kind: input, shape index: {}]
  %s3 = inlined_call_operand.hbm [shape: f32[16,128], index: 3, kind: output, shape index: {}]
  %s4 = sld [smem:[#allocation0]]
  $region30: #{tpu_custom_call.1} parent=0
    _
  %s6 = ssub.s32 1, %s4
  %s7 = scalar_select 0, %s6, %s4
  $region1: #{tpu_custom_call.1} parent=0
    #allocation2 [shape = 'u8[4096]{0}', space=vmem, size = 0x1000, scoped, tag = 'input window, operand 0, single buffered']
    #allocation3 [shape = 's32[1]{0}', space=sflag, size = 0x4, scoped, tag = 'scoped memory for tpu_custom_call.1']
    #allocation4 [shape = 's32[1]{0}', space=sflag, size = 0x4, scoped, tag = 'scoped memory for tpu_custom_call.1']
    #allocation5 [shape = 'u8[32768]{0}', space=vmem, size = 0x8000, scoped, tag = 'input window, operand 1, single buffered']
    #allocation6 [shape = 's32[1]{0}', space=sflag, size = 0x4, scoped, tag = 'scoped memory for tpu_custom_call.1']
    #allocation7 [shape = 'u8[8192]{0}', space=vmem, size = 0x2000, scoped, tag = 'output window, operand 0, single buffered']
    %8 = vsyncpa [#allocation3], 0
    %9 = vsyncpa [#allocation6], 0
    %10 = vsyncpa [#allocation4], 0
    // Predicated region
    $region2: #{tpu_custom_call.1} parent=1 // pred_check
      _
    $region3: #{tpu_custom_call.1} parent=1 // pred_check_branch
      %12 = sbr.rel (0) target = $region5
    $region4: #{tpu_custom_call.1} parent=1 // pred_region
      %s14 = ssub.s32 128, 128
      %15 = vsyncadd [#allocation3], %s14
      %s16 = sshll.u32 [#allocation2], 4
      %s17 = int_to_ptr.vmem [resolvable:$true] %s16
      %22 = dma.hbm_to_vmem [thread:$0]  %s0, 128, %s17, [#allocation3], 64, 64, 4
    $region5: #{tpu_custom_call.1} parent=1 // pred_fallthru
      _
    // Predicated region
    $region6: #{tpu_custom_call.1} parent=1 // pred_check
      _
    $region7: #{tpu_custom_call.1} parent=1 // pred_check_branch
      %24 = sbr.rel (0) target = $region9
    $region8: #{tpu_custom_call.1} parent=1 // pred_region
      %s26 = ssub.s32 1024, 1024
      %27 = vsyncadd [#allocation6], %s26
      %s28 = sshll.u32 [#allocation5], 4
      %s29 = int_to_ptr.vmem [resolvable:$true] %s28
      %34 = dma.hbm_to_vmem [thread:$0]  %s1, 1024, %s29, [#allocation6], 64, 64, 4
    $region9: #{tpu_custom_call.1} parent=1 // pred_fallthru
      _
    // Predicated region
    $region10: #{tpu_custom_call.1} parent=1 // pred_check
      _
    $region11: #{tpu_custom_call.1} parent=1 // pred_check_branch
      %36 = sbr.rel (0) target = $region13
    $region12: #{tpu_custom_call.1} parent=1 // pred_region
      _
    $region13: #{tpu_custom_call.1} parent=1 // pred_fallthru
      _
    // Predicated region
    $region14: #{tpu_custom_call.1} parent=1 // pred_check
      _
    $region15: #{tpu_custom_call.1} parent=1 // pred_check_branch
      %38 = sbr.rel (0) target = $region17
    $region16: #{tpu_custom_call.1} parent=1 // pred_region
      %39 = dma.done [#allocation3], 128
    $region17: #{tpu_custom_call.1} parent=1 // pred_fallthru
      _
    // Predicated region
    $region18: #{tpu_custom_call.1} parent=1 // pred_check
      _
    $region19: #{tpu_custom_call.1} parent=1 // pred_check_branch
      %41 = sbr.rel (0) target = $region21
    $region20: #{tpu_custom_call.1} parent=1 // pred_region
      %42 = dma.done [#allocation6], 1024
    $region21: #{tpu_custom_call.1} parent=1 // pred_fallthru
      _
    %v44 = vld [vmem:[#allocation2] sm:$0xf]
    %v45 = vld [vmem:[#allocation2 + $0x4] sm:$0xf]
    %v46 = vld [vmem:[#allocation5] sm:$0xf]
    %v47 = vld [vmem:[#allocation5 + $0x4] sm:$0xf]
    %v48 = vld [vmem:[#allocation5 + $0x8] sm:$0xf]
    %v49 = vld [vmem:[#allocation5 + $0xc] sm:$0xf]
    %v50 = vld [vmem:[#allocation5 + $0x10] sm:$0xf]
    %v51 = vld [vmem:[#allocation5 + $0x14] sm:$0xf]
    %v52 = vld [vmem:[#allocation5 + $0x18] sm:$0xf]
    %v53 = vld [vmem:[#allocation5 + $0x1c] sm:$0xf]
    %v54 = vld [vmem:[#allocation5 + $0x20] sm:$0xf]
    %v55 = vld [vmem:[#allocation5 + $0x24] sm:$0xf]
    %v56 = vld [vmem:[#allocation5 + $0x28] sm:$0xf]
    %v57 = vld [vmem:[#allocation5 + $0x2c] sm:$0xf]
    %v58 = vld [vmem:[#allocation5 + $0x30] sm:$0xf]
    %v59 = vld [vmem:[#allocation5 + $0x34] sm:$0xf]
    %v60 = vld [vmem:[#allocation5 + $0x38] sm:$0xf]
    %v61 = vld [vmem:[#allocation5 + $0x3c] sm:$0xf]
    %v62 = vld [vmem:[%s2] sm:$0x1]
    %v64 = vlaneseq
    %v65 = vshrl.u32 %v64, 7
    %v66 = vsub.s32 0, %v65
    %v67 = vrot.slane %v62, %v66
    %v71 = vunpack.c.l.b16 %v44
    %v72 = vunpack.c.l.b16 %v45
    %v73 = vpack.c.b16 %v72, %v71
    %v91 = vunpack.c.l.b16 %v46
    %v92 = vunpack.c.l.b16 %v47
    %v93 = vunpack.c.l.b16 %v48
    %v94 = vunpack.c.l.b16 %v49
    %v95 = vunpack.c.l.b16 %v50
    %v96 = vunpack.c.l.b16 %v51
    %v97 = vunpack.c.l.b16 %v52
    %v98 = vunpack.c.l.b16 %v53
    %v99 = vunpack.c.l.b16 %v54
    %v100 = vunpack.c.l.b16 %v55
    %v101 = vunpack.c.l.b16 %v56
    %v102 = vunpack.c.l.b16 %v57
    %v103 = vunpack.c.l.b16 %v58
    %v104 = vunpack.c.l.b16 %v59
    %v105 = vunpack.c.l.b16 %v60
    %v106 = vunpack.c.l.b16 %v61
    %v107 = vpack.c.b16 %v92, %v91
    %v108 = vpack.c.b16 %v94, %v93
    %v109 = vpack.c.b16 %v96, %v95
    %v110 = vpack.c.b16 %v98, %v97
    %v111 = vpack.c.b16 %v100, %v99
    %v112 = vpack.c.b16 %v102, %v101
    %v113 = vpack.c.b16 %v104, %v103
    %v114 = vpack.c.b16 %v106, %v105
    %123 = vmatprep.subr.bf16.mxu0 0
    %124 = vmatpush1.bf16.msra.mxu0 %v107
    %125 = vmatprep.subr.bf16.mxu0 0
    %126 = vmatpush1.bf16.msra.mxu0 %v108
    %127 = vmatprep.subr.bf16.mxu0 0
    %128 = vmatpush1.bf16.msra.mxu0 %v109
    %129 = vmatprep.subr.bf16.mxu0 0
    %130 = vmatpush1.bf16.msra.mxu0 %v110
    %131 = vmatprep.subr.bf16.mxu0 0
    %132 = vmatpush1.bf16.msra.mxu0 %v111
    %133 = vmatprep.subr.bf16.mxu0 0
    %134 = vmatpush1.bf16.msra.mxu0 %v112
    %135 = vmatprep.subr.bf16.mxu0 0
    %136 = vmatpush1.bf16.msra.mxu0 %v113
    %137 = vmatprep.subr.bf16.mxu0 0
    %138 = vmatpush1.bf16.msra.mxu0 %v114
    %139 = vmatprep.subr.bf16.mxu0 0
    %140 = vmatpush1.bf16.msra.mxu0 0
    %141 = vmatprep.subr.bf16.mxu0 0
    %142 = vmatpush1.bf16.msra.mxu0 0
    %143 = vmatprep.subr.bf16.mxu0 0
    %144 = vmatpush1.bf16.msra.mxu0 0
    %145 = vmatprep.subr.bf16.mxu0 0
    %146 = vmatpush1.bf16.msra.mxu0 0
    %147 = vmatprep.subr.bf16.mxu0 0
    %148 = vmatpush1.bf16.msra.mxu0 0
    %149 = vmatprep.subr.bf16.mxu0 0
    %150 = vmatpush1.bf16.msra.mxu0 0
    %151 = vmatprep.subr.bf16.mxu0 0
    %152 = vmatpush1.bf16.msra.mxu0 0
    %153 = vmatprep.subr.bf16.mxu0 0
    %154 = vmatpush1.bf16.msra.mxu0 0
    %155 = vmatprep.mubr.bf16.mxu0 0
    %156 = vmatmul.mubr.bf16.gmra.mrb[0].mxu0 %v73
    %v157 = vpop.f32.mrb[0].mxu0
    %v158 = vadd.f32 %v67, %v157
    %v159 = vpop.f32.mrb[0].mxu0
    %v160 = vpop.f32.mrb[0].mxu0
    %v161 = vadd.f32 %v67, %v160
    %v162 = vpop.f32.mrb[0].mxu0
    %163 = vdwg.mxu0
    %164 = vst [vmem:[#allocation7] sm:$0xff] %v158
    %165 = vst [vmem:[#allocation7 + $0x8] sm:$0xff] %v161
    // Predicated region
    $region22: #{tpu_custom_call.1} parent=1 // pred_check
      _
    $region23: #{tpu_custom_call.1} parent=1 // pred_check_branch
      %167 = sbr.rel (0) target = $region25
    $region24: #{tpu_custom_call.1} parent=1 // pred_region
      %s169 = ssub.s32 256, 256
      %170 = vsyncadd [#allocation4], %s169
      %s171 = sshll.u32 [#allocation7], 4
      %s172 = int_to_ptr.vmem [resolvable:$true] %s171
      %177 = dma.vmem_to_hbm [thread:$0]  %s172, 256, %s3, [#allocation4], 128, 128, 8
    $region25: #{tpu_custom_call.1} parent=1 // pred_fallthru
      _
    // Predicated region
    $region26: #{tpu_custom_call.1} parent=1 // pred_check
      _
    $region27: #{tpu_custom_call.1} parent=1 // pred_check_branch
      %179 = sbr.rel (0) target = $region29
    $region28: #{tpu_custom_call.1} parent=1 // pred_region
      %180 = dma.done [#allocation4], 256
    $region29: #{tpu_custom_call.1} parent=1 // pred_fallthru
      _
    %181 = vsyncpa [#allocation3], 1
    %182 = vsyncpa [#allocation6], 1
    %183 = vsyncpa [#allocation4], 1

</llo_original>
